<compile_context>
chip_gen: v7x
topology: tpu7x:2x2x1
jax: 0.10.0
libtpu: 0.0.40
codegen_flags: <defaults>
</compile_context>

<pallas_src>
import functools

import jax
import jax.numpy as jnp
from jax.experimental import pallas as pl
from jax.experimental.pallas import tpu as pltpu


def _round_up(x: int, m: int) -> int:
    return (x + m - 1) // m * m


# --------------------------------------------------------------------------- kernels

def _bigram_train_kernel(idx_ref, tgt_ref, tbl_ref, logits_ref, loss_ref, *, tm, v):
    """One grid step == TM tokens.

    idx_ref:    (N_pad,) int32 in SMEM (scalar prefetch) -- token ids.
    tgt_ref:    (TM, 1) int32 VMEM block -- targets for this step's tokens.
    tbl_ref:    (V_rows, V_pad) f32 resident embedding table (constant block).
    logits_ref: (TM, V_pad) f32 output block.
    loss_ref:   (TM, 1) f32 output block -- per-row cross-entropy.
    """
    i = pl.program_id(0)
    base = i * tm

    # In-VMEM row gather: one dynamic-slice load + store per token.
    def gather(j, carry):
        t = idx_ref[base + j]
        logits_ref[pl.ds(j, 1), :] = tbl_ref[pl.ds(t, 1), :]
        return carry

    jax.lax.fori_loop(0, tm, gather, 0)

    # Batched, numerically stable cross-entropy over the whole (TM, V_pad) block.
    logits = logits_ref[...]                                           # (TM, V_pad)
    col = jax.lax.broadcasted_iota(jnp.int32, logits.shape, 1)         # (TM, V_pad)
    x = jnp.where(col < v, logits, -jnp.inf)                           # mask pad lanes
    m = jnp.max(x, axis=-1, keepdims=True)                             # (TM, 1)
    lse = m + jnp.log(jnp.sum(jnp.exp(x - m), axis=-1, keepdims=True)) # (TM, 1)

    tgt = tgt_ref[...]                                                 # (TM, 1)
    picked = jnp.sum(jnp.where(col == tgt, logits, 0.0),
                     axis=-1, keepdims=True)                           # (TM, 1)
    loss_ref[...] = lse - picked


def _bigram_logits_kernel(idx_ref, tbl_ref, logits_ref, *, tm):
    """Inference path (targets=None): pure batched gather, no softmax epilogue."""
    i = pl.program_id(0)
    base = i * tm

    def gather(j, carry):
        t = idx_ref[base + j]
        logits_ref[pl.ds(j, 1), :] = tbl_ref[pl.ds(t, 1), :]
        return carry

    jax.lax.fori_loop(0, tm, gather, 0)


# --------------------------------------------------------------------------- wrappers

def _pad_table(emb_table):
    v_rows, v_cols = emb_table.shape
    vr = _round_up(v_rows, 8)
    vc = _round_up(v_cols, 128)
    return jnp.pad(emb_table.astype(jnp.float32),
                   ((0, vr - v_rows), (0, vc - v_cols)))


def _choose_tm(n: int, v_pad: int) -> int:
    """Tokens per grid step: sublane-aligned, large, but VMEM-friendly."""
    tm = min(256, _round_up(n, 8))
    # Keep the double-buffered (TM, V_pad) logits block within a modest VMEM budget.
    while tm > 8 and tm * v_pad * 4 * 2 > 8 * 1024 * 1024:
        tm //= 2
    return max(8, _round_up(tm, 8))


def _compiler_params(table_bytes: int, block_bytes: int):
    kwargs = dict(dimension_semantics=("parallel",))
    need = table_bytes + 2 * block_bytes + (1 << 20)
    if need > 12 * 1024 * 1024:
        kwargs["vmem_limit_bytes"] = min(2 * need, 64 * 1024 * 1024)
    return pltpu.CompilerParams(**kwargs)


def bigram_forward(idx, targets, emb_table):
    """Mirrors BigramLanguageModel.forward(idx, targets) with targets given:
    returns (logits of shape (B*T, V), scalar mean cross-entropy loss)."""
    B, T = idx.shape
    V = emb_table.shape[1]
    N = B * T

    tbl = _pad_table(emb_table)
    v_rows, v_pad = tbl.shape

    tm = _choose_tm(N, v_pad)
    n_steps = pl.cdiv(N, tm)
    n_pad = n_steps * tm

    idx_flat = jnp.pad(idx.reshape(-1).astype(jnp.int32), (0, n_pad - N))
    tgt_col = jnp.pad(targets.reshape(-1).astype(jnp.int32),
                      (0, n_pad - N)).reshape(n_pad, 1)

    grid_spec = pltpu.PrefetchScalarGridSpec(
        num_scalar_prefetch=1,                     # token ids land in SMEM
        grid=(n_steps,),
        in_specs=[
            pl.BlockSpec((tm, 1), lambda i, idx_r: (i, 0)),           # targets
            pl.BlockSpec((v_rows, v_pad), lambda i, idx_r: (0, 0)),   # resident table
        ],
        out_specs=[
            pl.BlockSpec((tm, v_pad), lambda i, idx_r: (i, 0)),       # logits
            pl.BlockSpec((tm, 1), lambda i, idx_r: (i, 0)),           # per-row loss
        ],
    )

    cost = pl.CostEstimate(
        flops=6 * N * v_pad,
        transcendentals=N * v_pad + N,
        bytes_accessed=2 * N * v_pad * 4 + v_rows * v_pad * 4 + N * 8,
    )

    logits_pad, loss_rows = pl.pallas_call(
        functools.partial(_bigram_train_kernel, tm=tm, v=V),
        grid_spec=grid_spec,
        out_shape=[
            jax.ShapeDtypeStruct((n_pad, v_pad), jnp.float32),
            jax.ShapeDtypeStruct((n_pad, 1), jnp.float32),
        ],
        compiler_params=_compiler_params(v_rows * v_pad * 4, tm * v_pad * 4),
        cost_estimate=cost,
    )(idx_flat, tgt_col, tbl)

    logits = logits_pad[:N, :V]                    # matches PyTorch logits.view(B*T, C)
    loss = jnp.sum(loss_rows[:N, 0]) / N
    return logits, loss


def bigram_logits_only(idx, emb_table):
    """Mirrors forward(idx, targets=None): returns ((B, T, V) logits, None)."""
    B, T = idx.shape
    V = emb_table.shape[1]
    N = B * T

    tbl = _pad_table(emb_table)
    v_rows, v_pad = tbl.shape

    tm = _choose_tm(N, v_pad)
    n_steps = pl.cdiv(N, tm)
    n_pad = n_steps * tm

    idx_flat = jnp.pad(idx.reshape(-1).astype(jnp.int32), (0, n_pad - N))

    grid_spec = pltpu.PrefetchScalarGridSpec(
        num_scalar_prefetch=1,
        grid=(n_steps,),
        in_specs=[
            pl.BlockSpec((v_rows, v_pad), lambda i, idx_r: (0, 0)),   # resident table
        ],
        out_specs=pl.BlockSpec((tm, v_pad), lambda i, idx_r: (i, 0)),
    )

    cost = pl.CostEstimate(
        flops=0,
        transcendentals=0,
        bytes_accessed=N * v_pad * 4 + v_rows * v_pad * 4 + N * 4,
    )

    logits_pad = pl.pallas_call(
        functools.partial(_bigram_logits_kernel, tm=tm),
        grid_spec=grid_spec,
        out_shape=jax.ShapeDtypeStruct((n_pad, v_pad), jnp.float32),
        compiler_params=_compiler_params(v_rows * v_pad * 4, tm * v_pad * 4),
        cost_estimate=cost,
    )(idx_flat, tbl)

    return logits_pad[:N, :V].reshape(B, T, V), None


# --------------------------------------------------------------------------- demo

if __name__ == "__main__":
    vocab_size = 65          # odd vocab on purpose: exercises the V->128 padding path
    B, T = 2, 8              # N = B*T = 16

    key = jax.random.PRNGKey(0)
    k_emb, k_idx, k_tgt = jax.random.split(key, 3)

    # nn.Embedding(vocab_size, vocab_size) default init ~ N(0, 1)
    emb_table = jax.random.normal(k_emb, (vocab_size, vocab_size), dtype=jnp.float32)
    idx = jax.random.randint(k_idx, (B, T), 0, vocab_size, dtype=jnp.int32)
    targets = jax.random.randint(k_tgt, (B, T), 0, vocab_size, dtype=jnp.int32)

    logits, loss = bigram_forward(idx, targets, emb_table)
    logits = jax.block_until_ready(logits)
    loss = jax.block_until_ready(loss)

    # Correctness vs. pure-JAX reference.
    ref_logits = emb_table[idx.reshape(-1)]
    ref_lse = jax.nn.logsumexp(ref_logits, axis=-1)
    ref_loss = jnp.mean(ref_lse - ref_logits[jnp.arange(B * T), targets.reshape(-1)])
    assert logits.shape == (B * T, vocab_size)
    assert jnp.array_equal(logits, ref_logits)            # in-VMEM gather -> bit-exact rows
    assert jnp.allclose(loss, ref_loss, atol=1e-5, rtol=1e-5)

    # Inference path (targets=None in PyTorch): (B, T, V) logits, loss is None.
    logits_btv, no_loss = bigram_logits_only(idx, emb_table)
    logits_btv = jax.block_until_ready(logits_btv)
    assert no_loss is None
    assert logits_btv.shape == (B, T, vocab_size)
    assert jnp.array_equal(logits_btv.reshape(B * T, vocab_size), ref_logits)

    print("KERNEL_OK")
</pallas_src>

<mosaic_0001>
module attributes {stable_mosaic.version = 11 : i64} {
  func.func @_bigram_train_kernel(%arg0: i32, %arg1: memref<16xi32, #tpu.memory_space<smem>>, %arg2: memref<16x1xi32, #tpu.memory_space<vmem>>, %arg3: memref<72x128xf32, #tpu.memory_space<vmem>>, %arg4: memref<16x128xf32, #tpu.memory_space<vmem>>, %arg5: memref<16x1xf32, #tpu.memory_space<vmem>>) attributes {dimension_semantics = [#tpu.dimension_semantics<parallel>], iteration_bounds = array<i64: 1>, scalar_prefetch = 1 : i64, scratch_operands = 0 : i64, tpu.core_type = #tpu.core_type<tc>, window_params = [{transform_indices = @transform_0, window_bounds = array<i64: 16, 1>}, {pipeline_mode = #tpu.pipeline_mode<synchronous>, transform_indices = @transform_1, window_bounds = array<i64: 72, 128>}, {transform_indices = @transform_2, window_bounds = array<i64: 16, 128>}, {transform_indices = @transform_3, window_bounds = array<i64: 16, 1>}]} {
    %c16_i32 = arith.constant 16 : i32
    %0 = arith.muli %arg0, %c16_i32 : i32
    %c0_i32 = arith.constant 0 : i32
    %c16_i32_0 = arith.constant 16 : i32
    %1 = arith.addi %c0_i32, %c16_i32_0 : i32
    %c1_i32 = arith.constant 1 : i32
    scf.for %arg6 = %c0_i32 to %1 step %c1_i32  : i32 {
      %26 = arith.addi %0, %arg6 : i32
      %27 = arith.index_cast %26 : i32 to index
      %28 = memref.load %arg1[%27] : memref<16xi32, #tpu.memory_space<smem>>
      %29 = arith.index_cast %28 : i32 to index
      %c0_11 = arith.constant 0 : index
      %30 = vector.load %arg3[%29, %c0_11] : memref<72x128xf32, #tpu.memory_space<vmem>>, vector<1x128xf32>
      %31 = arith.index_cast %arg6 : i32 to index
      %c0_12 = arith.constant 0 : index
      %32 = vector.load %arg4[%31, %c0_12] : memref<16x128xf32, #tpu.memory_space<vmem>>, vector<1x128xf32>
      tpu.vector_store %arg4[%31, %c0_12], %30 {strides = array<i32>} : memref<16x128xf32, #tpu.memory_space<vmem>>, vector<1x128xf32>,
    }
    %c16_i32_1 = arith.constant 16 : i32
    %c0 = arith.constant 0 : index
    %c0_2 = arith.constant 0 : index
    %2 = vector.load %arg4[%c0, %c0_2] : memref<16x128xf32, #tpu.memory_space<vmem>>, vector<16x128xf32>
    %3 = tpu.iota {dimensions = array<i32: 1>} : vector<16x128xi32>
    %c65_i32 = arith.constant 65 : i32
    %4 = vector.broadcast %c65_i32 : i32 to vector<16x128xi32>
    %5 = arith.cmpi slt, %3, %4 : vector<16x128xi32>
    %cst = arith.constant 0xFF800000 : f32
    %6 = vector.broadcast %cst : f32 to vector<16x128xf32>
    %7 = arith.select %5, %2, %6 : vector<16x128xi1>, vector<16x128xf32>
    %cst_3 = arith.constant dense<0xFF800000> : vector<16xf32>
    %8 = vector.multi_reduction <maximumf>, %7, %cst_3 [1] : vector<16x128xf32> to vector<16xf32>
    %9 = vector.shape_cast %8 : vector<16xf32> to vector<16x1xf32>
    %10 = vector.broadcast %9 : vector<16x1xf32> to vector<16x128xf32>
    %11 = arith.subf %7, %10 : vector<16x128xf32>
    %12 = math.exp %11 : vector<16x128xf32>
    %cst_4 = arith.constant dense<0.000000e+00> : vector<16xf32>
    %13 = vector.multi_reduction <add>, %12, %cst_4 [1] : vector<16x128xf32> to vector<16xf32>
    %14 = vector.shape_cast %13 : vector<16xf32> to vector<16x1xf32>
    %15 = math.log %14 : vector<16x1xf32>
    %16 = arith.addf %9, %15 : vector<16x1xf32>
    %c0_5 = arith.constant 0 : index
    %c0_6 = arith.constant 0 : index
    %17 = vector.load %arg2[%c0_5, %c0_6] : memref<16x1xi32, #tpu.memory_space<vmem>>, vector<16x1xi32>
    %18 = vector.broadcast %17 : vector<16x1xi32> to vector<16x128xi32>
    %19 = arith.cmpi eq, %3, %18 : vector<16x128xi32>
    %cst_7 = arith.constant 0.000000e+00 : f32
    %20 = vector.broadcast %cst_7 : f32 to vector<16x128xf32>
    %21 = arith.select %19, %2, %20 : vector<16x128xi1>, vector<16x128xf32>
    %cst_8 = arith.constant dense<0.000000e+00> : vector<16xf32>
    %22 = vector.multi_reduction <add>, %21, %cst_8 [1] : vector<16x128xf32> to vector<16xf32>
    %23 = vector.shape_cast %22 : vector<16xf32> to vector<16x1xf32>
    %24 = arith.subf %16, %23 : vector<16x1xf32>
    %c0_9 = arith.constant 0 : index
    %c0_10 = arith.constant 0 : index
    %25 = vector.load %arg5[%c0_9, %c0_10] : memref<16x1xf32, #tpu.memory_space<vmem>>, vector<16x1xf32>
    tpu.vector_store %arg5[%c0_9, %c0_10], %24 {strides = array<i32>} : memref<16x1xf32, #tpu.memory_space<vmem>>, vector<16x1xf32>,
    return
  }
  func.func @transform_0(%arg0: i32, %arg1: memref<16xi32, #tpu.memory_space<smem>>) -> (i32, i32) {
    %c0_i32 = arith.constant 0 : i32
    %c0_i32_0 = arith.constant 0 : i32
    return %arg0, %c0_i32 : i32, i32
  }
  func.func @transform_1(%arg0: i32, %arg1: memref<16xi32, #tpu.memory_space<smem>>) -> (i32, i32) {
    %c0_i32 = arith.constant 0 : i32
    %c0_i32_0 = arith.constant 0 : i32
    %c0_i32_1 = arith.constant 0 : i32
    return %c0_i32, %c0_i32_0 : i32, i32
  }
  func.func @transform_2(%arg0: i32, %arg1: memref<16xi32, #tpu.memory_space<smem>>) -> (i32, i32) {
    %c0_i32 = arith.constant 0 : i32
    %c0_i32_0 = arith.constant 0 : i32
    return %arg0, %c0_i32 : i32, i32
  }
  func.func @transform_3(%arg0: i32, %arg1: memref<16xi32, #tpu.memory_space<smem>>) -> (i32, i32) {
    %c0_i32 = arith.constant 0 : i32
    %c0_i32_0 = arith.constant 0 : i32
    return %arg0, %c0_i32 : i32, i32
  }
}

</mosaic_0001>

<llo_original>
// kernel: tpu_custom_call.1
$region0: #{tpu_custom_call.1}
  #allocation0 [shape = 'u32[]', space=smem, size = 0x4, offset = 0x4, fixed_abs, tag = 'smem constant byte address 0x4 - core index']
  #allocation1 [shape = 'u32[144,128]{1,0:T(1,128)}', space=vmem, size = 0x12000, scoped, tag = 'internal scratch']
  #allocation2 [shape = 's32[1]{0}', space=sflag, size = 0x4, scoped, tag = 'scoped memory for tpu_custom_call.1']
  #allocation3 [shape = 'u8[512]{0}', space=smem, size = 0x200, scoped, tag = 'prefetched SMEM operand 0']
  %s0 = inlined_call_operand.vmem [shape: s32[16], index: 0, kind: input, shape index: {}]
  %s1 = inlined_call_operand.vmem [shape: s32[16,1], index: 1, kind: input, shape index: {}]
  %s2 = inlined_call_operand.hbm [shape: f32[72,128], index: 2, kind: input, shape index: {}]
  %s3 = inlined_call_operand.hbm [shape: f32[16,128], index: 3, kind: output, shape index: {0}]
  %s4 = inlined_call_operand.vmem [shape: f32[16,1], index: 4, kind: output, shape index: {1}]
  %5 = xla_tuple %s3, %s4
  %s6 = sld [smem:[#allocation0]]
  $region37: #{tpu_custom_call.1} parent=0
    _
  %s8 = ssub.s32 1, %s6
  %s9 = scalar_select 0, %s8, %s6
  %s10 = sshll.u32 %s0, 4
  %s11 = int_to_ptr.vmem [resolvable:$true] %s10
  %13 = dma.vmem_to_smem %s11, 16, [#allocation3], [#allocation2]
  %14 = dma.done [#allocation2], 16
  %15 = sfence
  $region1: #{tpu_custom_call.1} parent=0
    #allocation4 [shape = 'u8[36864]{0}', space=vmem, size = 0x9000, scoped, tag = 'input window, operand 2, single buffered']
    #allocation5 [shape = 's32[1]{0}', space=sflag, size = 0x4, scoped, tag = 'scoped memory for tpu_custom_call.1']
    #allocation6 [shape = 's32[1]{0}', space=sflag, size = 0x4, scoped, tag = 'scoped memory for tpu_custom_call.1']
    #allocation7 [shape = 'u8[8192]{0}', space=vmem, size = 0x2000, scoped, tag = 'output window, operand 0, single buffered']
    %16 = vsyncpa [#allocation5], 0
    %17 = vsyncpa [#allocation6], 0
    // Predicated region
    $region2: #{tpu_custom_call.1} parent=1 // pred_check
      _
    $region3: #{tpu_custom_call.1} parent=1 // pred_check_branch
      %19 = sbr.rel (0) target = $region5
    $region4: #{tpu_custom_call.1} parent=1 // pred_region
      _
    $region5: #{tpu_custom_call.1} parent=1 // pred_fallthru
      _
    // Predicated region
    $region6: #{tpu_custom_call.1} parent=1 // pred_check
      _
    $region7: #{tpu_custom_call.1} parent=1 // pred_check_branch
      %21 = sbr.rel (0) target = $region9
    $region8: #{tpu_custom_call.1} parent=1 // pred_region
      %s23 = ssub.s32 1152, 1152
      %24 = vsyncadd [#allocation5], %s23
      %s25 = sshll.u32 [#allocation4], 4
      %s26 = int_to_ptr.vmem [resolvable:$true] %s25
      %31 = dma.hbm_to_vmem [thread:$0]  %s2, 1152, %s26, [#allocation5], 128, 128, 8
    $region9: #{tpu_custom_call.1} parent=1 // pred_fallthru
      _
    // Predicated region
    $region10: #{tpu_custom_call.1} parent=1 // pred_check
      _
    $region11: #{tpu_custom_call.1} parent=1 // pred_check_branch
      %33 = sbr.rel (0) target = $region13
    $region12: #{tpu_custom_call.1} parent=1 // pred_region
      %34 = dma.done [#allocation5], 1152
    $region13: #{tpu_custom_call.1} parent=1 // pred_fallthru
      _
    %s35 = smul.u32 0, 16
    loop: start=0, step=1, limit=16
    $region14: #{tpu_custom_call.1} parent=1 // loop_pre_header
      _
    $region15: #{tpu_custom_call.1} parent=1 // loop_header
      %s37 = sphi 0, %s41
      %p38 = scmp.ge.s32.totalorder %s37, 16
    $region16: #{tpu_custom_call.1} parent=1 // loop_header_branch
      %40 = sbr.rel (%p38) target = $region20
    $region17: #{tpu_custom_call.1} parent=1 // loop_body
      %s42 = sadd.s32 %s35, %s37
      %s43 = sld [smem:[#allocation3 + %s42]]
      %s44 = scalar_lea.vmem [#allocation4], %s43
      %v45 = vld [vmem:[%s44] sm:$0x1]
      %s46 = scalar_lea.vmem [#allocation7], %s37
      %47 = vst [vmem:[%s46] sm:$0x1] %v45
    $region18: #{tpu_custom_call.1} parent=1 // loop_footer
      %s41 = sadd.s32 1, %s37
    $region19: #{tpu_custom_call.1} parent=1 // loop_footer_branch
      %36 = sbr.rel target = $region15
    $region20: #{tpu_custom_call.1} parent=1 // loop_exit
      _
    %v48 = vld [vmem:[#allocation7] sm:$0xff]
    %v49 = vld [vmem:[#allocation7 + $0x8] sm:$0xff]
    %v50 = vlaneseq
    %v51 = vand.u32 %v50, 127
    %vm52 = vcmp.lt.s32.totalorder %v51, 65
    %v53 = vsel %vm52, %v48, -inf
    %v54 = vsel %vm52, %v49, -inf
    %55 = vmax.xlane.f32.xlu0 %v53
    %v56 = vpop.xlane.xlu0 %55
    %57 = vmax.xlane.f32.xlu0 %v54
    %v58 = vpop.xlane.xlu0 %57
    %v59 = vsub.f32 %v53, %v56
    %v60 = vsub.f32 %v54, %v58
    %v61 = vmul.f32 %v59, 1.442695
    %v62 = vpow.pop %v61
    %v63 = vmul.f32 %v60, 1.442695
    %v64 = vpow.pop %v63
    %65 = vadd.xlane.f32.xlu0 %v62
    %v66 = vpop.xlane.xlu0 %65
    %67 = vadd.xlane.f32.xlu0 %v64
    %v68 = vpop.xlane.xlu0 %67
    %v69 = vlog2.pop %v66
    %v70 = vmul.f32 %v69, 0.6931472
    %v71 = vlog2.pop %v68
    %v72 = vmul.f32 %v71, 0.6931472
    %v73 = vadd.f32 %v56, %v70
    %v74 = vadd.f32 %v58, %v72
    %v75 = vld [vmem:[%s1] sm:$0xff]
    %v76 = vld [vmem:[%s1 + $0x8] sm:$0xff]
    %77 = vset.pattern.permute.xlu0 0
    %78 = vperm.xlu0 %77, %v75
    %v79 = vpop.permute.xlu0 %78
    %80 = vset.pattern.permute.xlu0 0
    %81 = vperm.xlu0 %80, %v76
    %v82 = vpop.permute.xlu0 %81
    %vm83 = vcmp.eq.s32.totalorder %v51, %v79
    %vm84 = vcmp.eq.s32.totalorder %v51, %v82
    %v85 = vsel %vm83, %v48, 0.0
    %v86 = vsel %vm84, %v49, 0.0
    %87 = vadd.xlane.f32.xlu0 %v85
    %v88 = vpop.xlane.xlu0 %87
    %89 = vadd.xlane.f32.xlu0 %v86
    %v90 = vpop.xlane.xlu0 %89
    %v91 = vsub.f32 %v73, %v88
    %v92 = vsub.f32 %v74, %v90
    %vm93 = vcmask 7168
    %94 = vst.msk [vmem:[%s4] sm:$0xff] %vm93, %v91
    %95 = vst.msk [vmem:[%s4 + $0x8] sm:$0xff] %vm93, %v92
    // Predicated region
    $region21: #{tpu_custom_call.1} parent=1 // pred_check
      _
    $region22: #{tpu_custom_call.1} parent=1 // pred_check_branch
      %97 = sbr.rel (0) target = $region24
    $region23: #{tpu_custom_call.1} parent=1 // pred_region
      %s99 = ssub.s32 256, 256
      %100 = vsyncadd [#allocation6], %s99
      %s101 = sshll.u32 [#allocation7], 4
      %s102 = int_to_ptr.vmem [resolvable:$true] %s101
      %107 = dma.vmem_to_hbm [thread:$0]  %s102, 256, %s3, [#allocation6], 128, 128, 8
    $region24: #{tpu_custom_call.1} parent=1 // pred_fallthru
      _
    // Predicated region
    $region25: #{tpu_custom_call.1} parent=1 // pred_check
      _
    $region26: #{tpu_custom_call.1} parent=1 // pred_check_branch
      %109 = sbr.rel (0) target = $region28
    $region27: #{tpu_custom_call.1} parent=1 // pred_region
      _
    $region28: #{tpu_custom_call.1} parent=1 // pred_fallthru
      _
    // Predicated region
    $region29: #{tpu_custom_call.1} parent=1 // pred_check
      _
    $region30: #{tpu_custom_call.1} parent=1 // pred_check_branch
      %111 = sbr.rel (0) target = $region32
    $region31: #{tpu_custom_call.1} parent=1 // pred_region
      %112 = dma.done [#allocation6], 256
    $region32: #{tpu_custom_call.1} parent=1 // pred_fallthru
      _
    // Predicated region
    $region33: #{tpu_custom_call.1} parent=1 // pred_check
      _
    $region34: #{tpu_custom_call.1} parent=1 // pred_check_branch
      %114 = sbr.rel (0) target = $region36
    $region35: #{tpu_custom_call.1} parent=1 // pred_region
      _
    $region36: #{tpu_custom_call.1} parent=1 // pred_fallthru
      _
    %115 = vsyncpa [#allocation5], 1
    %116 = vsyncpa [#allocation6], 1

</llo_original>
